<compile_context>
chip_gen: v7x
topology: tpu7x:2x2x1
jax: 0.10.0
libtpu: 0.0.40
codegen_flags: <defaults>
</compile_context>

<pallas_src>
import numpy as np
import jax
import jax.numpy as jnp
from jax.experimental import pallas as pl
from jax.experimental.pallas import tpu as pltpu


def _pos_emb_kernel(coef_ref, x_ref, o_ref):
    # coef_ref: (2, W) f32 -- row 0: tiled frequencies, row 1: tiled phases
    # x_ref:    (TB, R) f32 -- R timesteps packed per output row
    # o_ref:    (TB, W) f32 -- W = R * dim lanes: [emb(x0) | emb(x1) | ... ]
    TB, R = x_ref.shape
    W = o_ref.shape[-1]
    dim = W // R

    freq = coef_ref[0:1, :]    # (1, W)
    phase = coef_ref[1:2, :]   # (1, W)

    # Broadcast each packed timestep across its own `dim`-wide lane block
    # (pure VPU: iota + (R-1) selects; exact f32, no relayout / no MXU).
    x_lane = x_ref[:, 0:1]
    if R > 1:
        lane = jax.lax.broadcasted_iota(jnp.int32, (TB, W), 1)
        for i in range(1, R):
            x_lane = jnp.where(lane >= i * dim, x_ref[:, i:i + 1], x_lane)

    # sin(t) on the first half of each block, sin(t + pi/2) == cos(t) on the
    # second half -> a single transcendental pass over the full lane-dense row.
    o_ref[...] = jnp.sin(x_lane * freq + phase)


def sinusoidal_pos_emb(x, dim):
    """x: (B,) float timesteps -> (B, dim) embedding [sin | cos], matching torch."""
    assert dim % 2 == 0 and dim >= 4, "dim must be even and >= 4 (half_dim-1 > 0)"
    x = jnp.asarray(x, jnp.float32)
    B = x.shape[0]

    # Trace-time constants (numpy): frequencies and the sin/cos phase offsets.
    half = dim // 2
    k = np.arange(half, dtype=np.float32)
    scale = np.float32(-(np.log(np.float32(10000.0)) / np.float32(half - 1)))
    freq_half = np.exp(k * scale).astype(np.float32)
    freq_full = np.concatenate([freq_half, freq_half])                      # (dim,)
    phase_full = np.concatenate([np.zeros(half, dtype=np.float32),
                                 np.full(half, np.pi / 2, dtype=np.float32)])

    # Pack R batch rows per 128-lane output row when dim < 128 (lane-dense stores).
    if dim < 128 and 128 % dim == 0 and B % (128 // dim) == 0:
        R = 128 // dim
    else:
        R = 1
    W = R * dim
    rows = B // R

    coef = jnp.asarray(np.stack([np.tile(freq_full, R),
                                 np.tile(phase_full, R)]))                  # (2, W)

    # Batch tile: largest "nice" divisor of `rows` (keeps VMEM bounded, lets the
    # grid pipeline the HBM writeback for big batches).
    TB = rows
    for cand in (1024, 512, 256, 128, 64, 32, 16, 8):
        if cand <= rows and rows % cand == 0:
            TB = cand
            break

    out = pl.pallas_call(
        _pos_emb_kernel,
        out_shape=jax.ShapeDtypeStruct((rows, W), jnp.float32),
        grid=(rows // TB,),
        in_specs=[
            pl.BlockSpec((2, W), lambda i: (0, 0)),     # freq/phase constants
            pl.BlockSpec((TB, R), lambda i: (i, 0)),    # packed timesteps
        ],
        out_specs=pl.BlockSpec((TB, W), lambda i: (i, 0)),
        compiler_params=pltpu.CompilerParams(
            dimension_semantics=("parallel",)),
    )(coef, x.reshape(rows, R))

    # (rows, R*dim) and (B, dim) share the same row-major layout -> free reshape.
    return out.reshape(B, dim)


def _reference(x, dim):
    half = dim // 2
    emb = jnp.exp(jnp.arange(half, dtype=jnp.float32)
                  * -(jnp.log(jnp.float32(10000.0)) / (half - 1)))
    emb = x.astype(jnp.float32)[:, None] * emb[None, :]
    return jnp.concatenate([jnp.sin(emb), jnp.cos(emb)], axis=-1)


if __name__ == "__main__":
    key = jax.random.PRNGKey(0)

    # Shipped shape: B=8 timesteps, dim=64 (packed lane-dense path, R=2).
    B, dim = 8, 64
    x = jax.random.uniform(key, (B,), jnp.float32, 0.0, 20.0)
    out = jax.block_until_ready(sinusoidal_pos_emb(x, dim))
    ref = _reference(x, dim)
    assert out.shape == (B, dim) and out.dtype == jnp.float32
    assert jnp.allclose(out, ref, atol=1e-4, rtol=1e-4)

    # Already-lane-dense path (dim multiple of 128) with a multi-tile batch grid.
    B2, dim2 = 2048, 128
    x2 = jax.random.uniform(jax.random.PRNGKey(1), (B2,), jnp.float32, 0.0, 20.0)
    out2 = jax.block_until_ready(sinusoidal_pos_emb(x2, dim2))
    ref2 = _reference(x2, dim2)
    assert out2.shape == (B2, dim2)
    assert jnp.allclose(out2, ref2, atol=1e-4, rtol=1e-4)

    print("KERNEL_OK")
</pallas_src>

<mosaic_0001>
module attributes {stable_mosaic.version = 11 : i64} {
  func.func @_pos_emb_kernel(%arg0: i32, %arg1: memref<2x128xf32, #tpu.memory_space<vmem>>, %arg2: memref<4x2xf32, #tpu.memory_space<vmem>>, %arg3: memref<4x128xf32, #tpu.memory_space<vmem>>) attributes {dimension_semantics = [#tpu.dimension_semantics<parallel>], iteration_bounds = array<i64: 1>, scalar_prefetch = 0 : i64, scratch_operands = 0 : i64, tpu.core_type = #tpu.core_type<tc>, window_params = [{pipeline_mode = #tpu.pipeline_mode<synchronous>, transform_indices = @transform_0, window_bounds = array<i64: 2, 128>}, {transform_indices = @transform_1, window_bounds = array<i64: 4, 2>}, {transform_indices = @transform_2, window_bounds = array<i64: 4, 128>}]} {
    %c0 = arith.constant 0 : index
    %c0_0 = arith.constant 0 : index
    %0 = vector.load %arg1[%c0, %c0_0] : memref<2x128xf32, #tpu.memory_space<vmem>>, vector<1x128xf32>
    %c1 = arith.constant 1 : index
    %c0_1 = arith.constant 0 : index
    %1 = vector.load %arg1[%c1, %c0_1] : memref<2x128xf32, #tpu.memory_space<vmem>>, vector<1x128xf32>
    %c0_2 = arith.constant 0 : index
    %c0_3 = arith.constant 0 : index
    %2 = vector.load %arg2[%c0_2, %c0_3] : memref<4x2xf32, #tpu.memory_space<vmem>>, vector<4x1xf32>
    %3 = tpu.iota {dimensions = array<i32: 1>} : vector<4x128xi32>
    %c64_i32 = arith.constant 64 : i32
    %4 = vector.broadcast %c64_i32 : i32 to vector<4x128xi32>
    %5 = arith.cmpi sge, %3, %4 : vector<4x128xi32>
    %c0_4 = arith.constant 0 : index
    %c1_5 = arith.constant 1 : index
    %6 = vector.load %arg2[%c0_4, %c1_5] : memref<4x2xf32, #tpu.memory_space<vmem>>, vector<4x1xf32>
    %7 = vector.shape_cast %6 : vector<4x1xf32> to vector<4x1xf32>
    %8 = vector.broadcast %7 : vector<4x1xf32> to vector<4x128xf32>
    %9 = vector.shape_cast %2 : vector<4x1xf32> to vector<4x1xf32>
    %10 = vector.broadcast %9 : vector<4x1xf32> to vector<4x128xf32>
    %11 = arith.select %5, %8, %10 : vector<4x128xi1>, vector<4x128xf32>
    %12 = vector.broadcast %0 : vector<1x128xf32> to vector<4x128xf32>
    %13 = arith.mulf %11, %12 : vector<4x128xf32>
    %14 = vector.broadcast %1 : vector<1x128xf32> to vector<4x128xf32>
    %15 = arith.addf %13, %14 : vector<4x128xf32>
    %16 = math.sin %15 : vector<4x128xf32>
    %c0_6 = arith.constant 0 : index
    %c0_7 = arith.constant 0 : index
    %17 = vector.load %arg3[%c0_6, %c0_7] : memref<4x128xf32, #tpu.memory_space<vmem>>, vector<4x128xf32>
    tpu.vector_store %arg3[%c0_6, %c0_7], %16 {strides = array<i32>} : memref<4x128xf32, #tpu.memory_space<vmem>>, vector<4x128xf32>,
    return
  }
  func.func @transform_0(%arg0: i32) -> (i32, i32) {
    %c0_i32 = arith.constant 0 : i32
    %c0_i32_0 = arith.constant 0 : i32
    %c0_i32_1 = arith.constant 0 : i32
    return %c0_i32, %c0_i32_0 : i32, i32
  }
  func.func @transform_1(%arg0: i32) -> (i32, i32) {
    %c0_i32 = arith.constant 0 : i32
    %c0_i32_0 = arith.constant 0 : i32
    return %arg0, %c0_i32 : i32, i32
  }
  func.func @transform_2(%arg0: i32) -> (i32, i32) {
    %c0_i32 = arith.constant 0 : i32
    %c0_i32_0 = arith.constant 0 : i32
    return %arg0, %c0_i32 : i32, i32
  }
}

</mosaic_0001>

<llo_original>
// kernel: tpu_custom_call.1
$region0: #{tpu_custom_call.1}
  #allocation0 [shape = 'u32[]', space=smem, size = 0x4, offset = 0x4, fixed_abs, tag = 'smem constant byte address 0x4 - core index']
  #allocation1 [shape = 'u32[144,128]{1,0:T(1,128)}', space=vmem, size = 0x12000, scoped, tag = 'internal scratch']
  %s0 = inlined_call_operand.vmem [shape: f32[2,128], index: 0, kind: input, shape index: {}]
  %s1 = inlined_call_operand.vmem [shape: f32[4,2], index: 1, kind: input, shape index: {}]
  %s2 = inlined_call_operand.hbm [shape: f32[4,128], index: 2, kind: output, shape index: {}]
  %s3 = sld [smem:[#allocation0]]
  $region18: #{tpu_custom_call.1} parent=0
    _
  %s5 = ssub.s32 1, %s3
  %s6 = scalar_select 0, %s5, %s3
  $region1: #{tpu_custom_call.1} parent=0
    #allocation2 [shape = 'u8[2048]{0}', space=vmem, size = 0x800, scoped, tag = 'output window, operand 0, single buffered']
    #allocation3 [shape = 's32[1]{0}', space=sflag, size = 0x4, scoped, tag = 'scoped memory for tpu_custom_call.1']
    %7 = vsyncpa [#allocation3], 0
    // Predicated region
    $region2: #{tpu_custom_call.1} parent=1 // pred_check
      _
    $region3: #{tpu_custom_call.1} parent=1 // pred_check_branch
      %9 = sbr.rel (0) target = $region5
    $region4: #{tpu_custom_call.1} parent=1 // pred_region
      _
    $region5: #{tpu_custom_call.1} parent=1 // pred_fallthru
      _
    // Predicated region
    $region6: #{tpu_custom_call.1} parent=1 // pred_check
      _
    $region7: #{tpu_custom_call.1} parent=1 // pred_check_branch
      %11 = sbr.rel (0) target = $region9
    $region8: #{tpu_custom_call.1} parent=1 // pred_region
      _
    $region9: #{tpu_custom_call.1} parent=1 // pred_fallthru
      _
    %v12 = vld [vmem:[%s0] sm:$0x1]
    %v13 = vld [vmem:[%s0 + $0x1] sm:$0x1]
    %v14 = vld [vmem:[%s1] sm:$0xf]
    %v15 = vlaneseq
    %v16 = vand.u32 %v15, 127
    %vm17 = vcmp.ge.s32.totalorder %v16, 64
    %19 = vset.pattern.permute.xlu0 1
    %20 = vperm.xlu0 %19, %v14
    %v21 = vpop.permute.xlu0 %20
    %23 = vset.pattern.permute.xlu0 0
    %24 = vperm.xlu0 %23, %v14
    %v25 = vpop.permute.xlu0 %24
    %v27 = vsel %vm17, %v21, %v25
    %v28 = vlaneseq
    %v29 = vshrl.u32 %v28, 7
    %v30 = vsub.s32 0, %v29
    %v31 = vrot.slane %v12, %v30
    %v32 = vmul.f32 %v27, %v31
    %v33 = vlaneseq
    %v34 = vshrl.u32 %v33, 7
    %v35 = vsub.s32 0, %v34
    %v36 = vrot.slane %v13, %v35
    %v37 = vadd.f32 %v32, %v36
    %v38 = vand.u32 2147483647, %v37
    %vm39 = vcmp.le.f32.partialorder %v38, 0.7853982
    %vm40 = vcmp.lt.s32.totalorder %v37, 0
    %v41 = vand.u32 %v37, 2139095040
    %v42 = vshrl.u32 %v41, 23
    %v43 = vsub.s32 %v42, 127
    %v44 = vand.u32 2147483647, %v37
    %v45 = vand.u32 %v44, 8388607
    %v46 = vor.u32 %v45, 8388608
    %v47 = vsub.s32 0, %v46
    %v48 = vadd.s32 %v43, 1
    %vm49 = vcmp.gt.s32.totalorder %v48, 0
    %v50 = vsel %vm49, %v48, 0
    %v51 = vshrl.u32 %v50, 5
    %v52 = vand.u32 %v50, 31
    %v53 = vsub.s32 32, %v52
    %v54 = vshrl.u32 683565275, %v53
    %v55 = vshll.u32 683565275, %v52
    %v56 = vshrl.u32 2475754826, %v53
    %v57 = vor.u32 %v55, %v56
    %v58 = vshll.u32 2475754826, %v52
    %v59 = vshrl.u32 2131351028, %v53
    %v60 = vor.u32 %v58, %v59
    %v61 = vshll.u32 2131351028, %v52
    %v62 = vshrl.u32 2102212464, %v53
    %v63 = vor.u32 %v61, %v62
    %v64 = vshll.u32 2102212464, %v52
    %v65 = vshrl.u32 920167782, %v53
    %v66 = vor.u32 %v64, %v65
    %v67 = vshll.u32 920167782, %v52
    %v68 = vshrl.u32 1326507024, %v53
    %v69 = vor.u32 %v67, %v68
    %vm70 = vcmp.lt.s32.totalorder %v51, 1
    %vm71 = vcmp.lt.s32.totalorder %v51, 2
    %vm72 = vcmp.lt.s32.totalorder %v51, 3
    %vm73 = vcmp.lt.s32.totalorder %v51, 4
    %v74 = vsel %vm70, %v54, %v57
    %v75 = vsel %vm73, %v63, 2102212464
    %v76 = vsel %vm72, %v60, %v75
    %v77 = vsel %vm71, %v74, %v76
    %v78 = vsel %vm70, %v57, %v60
    %v79 = vsel %vm73, %v66, 920167782
    %v80 = vsel %vm72, %v63, %v79
    %v81 = vsel %vm71, %v78, %v80
    %v82 = vsel %vm70, %v60, %v63
    %v83 = vsel %vm73, %v69, 1326507024
    %v84 = vsel %vm72, %v66, %v83
    %v85 = vsel %vm71, %v82, %v84
    %v86 = vshll.u32 %v46, 8
    %v87 = vmul.u32.u64.compose %v86, %v85
    %v88 = vextract.low.u32 %v87
    %v89 = vextract.high.u32 %v87
    %v90 = vmul.u32.u64.compose %v86, %v81
    %v91 = vextract.low.u32 %v90
    %v92 = vextract.high.u32 %v90
    %v93 = vmul.u32 %v86, %v77
    %v94 = vadd.s32 %v89, %v91
    %vm95 = vc.u32 %v89, %v91
    %v96 = vadd.s32 %v92, 1
    %v97 = vsel %vm95, %v96, %v92
    %v98 = vadd.s32 %v93, %v97
    %v99 = vadd.s32 %v98, 536870912
    %v100 = vshrl.u32 %v99, 30
    %v101 = vshll.u32 %v100, 30
    %v102 = vsub.s32 %v98, %v101
    %vm103 = vcmp.lt.s32.totalorder %v102, 0
    %v104 = vsub.s32 0, %v102
    %v105 = vsel %vm103, %v104, %v102
    %v106 = vclz %v105
    %v107 = vsub.s32 %v106, 2
    %vm108 = vcmp.gt.s32.totalorder 0, %v107
    %v109 = vsel %vm108, 0, %v107
    %v110 = vsub.s32 32, %v109
    %v111 = vshll.u32 %v102, %v109
    %v112 = vshrl.u32 %v94, %v110
    %v113 = vor.u32 %v111, %v112
    %v114 = vsub.s32 4294967266, %v109
    %v115 = vadd.s32 %v114, 127
    %v116 = vshll.u32 %v115, 23
    %v117 = vor.u32 4788187, %v116
    %v118 = vand.u32 2147483647, %v117
    %v120 = vcvt.s32.f32 %v113
    %v121 = vmul.f32 %v120, %v118
    %v122 = vxor.u32 %v121, 2147483648
    %v123 = vsel %vm40, %v122, %v121
    %v124 = vsub.s32 4, %v100
    %v125 = vsel %vm40, %v124, %v100
    %v126 = vsel %vm39, %v37, %v123
    %v127 = vsel %vm39, 0, %v125
    %v128 = vcosq.f32.pop %v126
    %v129 = vsinq.f32.pop %v126
    %vm130 = vweird.f32 %v37
    %v131 = vadd.s32 %v127, 3
    %v132 = vand.u32 %v131, 3
    %vm133 = vcmp.lt.s32.totalorder %v132, 2
    %vm134 = vcmp.eq.s32.totalorder %v132, 0
    %v135 = vxor.u32 %v129, 2147483648
    %v136 = vsel %vm134, %v128, %v135
    %vm137 = vcmp.eq.s32.totalorder %v132, 2
    %v138 = vxor.u32 %v128, 2147483648
    %v139 = vsel %vm137, %v138, %v129
    %v140 = vsel %vm133, %v136, %v139
    %v141 = vsel %vm130, nan, %v140
    %142 = vst [vmem:[#allocation2] sm:$0xf] %v141
    // Predicated region
    $region10: #{tpu_custom_call.1} parent=1 // pred_check
      _
    $region11: #{tpu_custom_call.1} parent=1 // pred_check_branch
      %144 = sbr.rel (0) target = $region13
    $region12: #{tpu_custom_call.1} parent=1 // pred_region
      %s146 = ssub.s32 64, 64
      %147 = vsyncadd [#allocation3], %s146
      %s149 = sshll.u32 [#allocation2], 4
      %s150 = int_to_ptr.vmem [resolvable:$true] %s149
      %152 = dma.vmem_to_hbm [thread:$0]  %s150, 64, %s2, [#allocation3]
    $region13: #{tpu_custom_call.1} parent=1 // pred_fallthru
      _
    // Predicated region
    $region14: #{tpu_custom_call.1} parent=1 // pred_check
      _
    $region15: #{tpu_custom_call.1} parent=1 // pred_check_branch
      %154 = sbr.rel (0) target = $region17
    $region16: #{tpu_custom_call.1} parent=1 // pred_region
      %155 = dma.done [#allocation3], 64
    $region17: #{tpu_custom_call.1} parent=1 // pred_fallthru
      _
    %156 = vsyncpa [#allocation3], 1

</llo_original>
